<compile_context>
chip_gen: v6e
topology: v6e:2x2x1
jax: 0.10.0
libtpu: 0.0.40
codegen_flags: <defaults>
</compile_context>

<pallas_src>
import math
from functools import partial

import numpy as np
import jax
import jax.numpy as jnp
from jax import lax
from jax.experimental import pallas as pl
from jax.experimental.pallas import tpu as pltpu


_SMALL_BYTES_LIMIT = 4 * 1024 * 1024        # whole-batch-resident threshold
_TILE_BUDGET_BYTES = 16 * 1024 * 1024       # double-buffered tile working set
_VMEM_LIMIT_BYTES = 32 * 1024 * 1024        # scoped VMEM (safe on v5e/v6e/v7x)


# ---------------------------------------------------------------------------
# Small path: whole batch resident, lane-dense (H*W flattened), roll in-kernel.
# ---------------------------------------------------------------------------
def _cutmix_small_kernel(box_ref, img_ref, mask_ref, img_out_ref, mask_out_ref,
                         *, B, W):
    # box_ref (SMEM via scalar prefetch): [y1, y2, x1, x2]
    y1 = box_ref[0]
    y2 = box_ref[1]
    x1 = box_ref[2]
    x2 = box_ref[3]
    HW = img_ref.shape[-1]
    w_shift = W.bit_length() - 1            # W is a power of two on this path
    flat = lax.broadcasted_iota(jnp.int32, (1, HW), 1)
    row = flat >> w_shift                   # flat // W
    col = flat & (W - 1)                    # flat %  W
    inside = (row >= y1) & (row < y2) & (col >= x1) & (col < x2)   # (1, HW)

    # Static unrolled loop over the (small) batch; rolled source is read from
    # the already-resident VMEM block, so HBM reads img/mask exactly once.
    for b in range(B):
        s = (b - 1) % B                     # torch.roll(x, 1, 0): out[b]=in[b-1]
        img_out_ref[b] = jnp.where(inside, img_ref[s], img_ref[b])
        mask_out_ref[b] = jnp.where(inside, mask_ref[s], mask_ref[b])


@jax.jit
def _cutmix_paste_small(img, mask, box):
    B, C, H, W = img.shape
    HW = H * W
    img_f = img.reshape(B, C, HW)           # contiguous merge: no data movement
    mask_f = mask.reshape(B, 1, HW)

    kernel = partial(_cutmix_small_kernel, B=B, W=W)
    out_img, out_mask = pl.pallas_call(
        kernel,
        out_shape=(jax.ShapeDtypeStruct((B, C, HW), img.dtype),
                   jax.ShapeDtypeStruct((B, 1, HW), mask.dtype)),
        grid_spec=pltpu.PrefetchScalarGridSpec(
            num_scalar_prefetch=1,
            grid=(1,),
            in_specs=[
                pl.BlockSpec((B, C, HW), lambda i, box: (0, 0, 0)),
                pl.BlockSpec((B, 1, HW), lambda i, box: (0, 0, 0)),
            ],
            out_specs=[
                pl.BlockSpec((B, C, HW), lambda i, box: (0, 0, 0)),
                pl.BlockSpec((B, 1, HW), lambda i, box: (0, 0, 0)),
            ],
        ),
        compiler_params=pltpu.CompilerParams(
            dimension_semantics=("arbitrary",)),
    )(box, img_f, mask_f)
    return out_img.reshape(B, C, H, W), out_mask.reshape(B, H, W)


# ---------------------------------------------------------------------------
# Tiled path: grid over (batch, H-tiles); roll expressed via index_map.
# ---------------------------------------------------------------------------
def _cutmix_tiled_kernel(box_ref, img_ref, img_r_ref, mask_ref, mask_r_ref,
                         img_out_ref, mask_out_ref, *, TH):
    y1 = box_ref[0]
    y2 = box_ref[1]
    x1 = box_ref[2]
    x2 = box_ref[3]
    W = img_ref.shape[-1]
    h0 = pl.program_id(1) * TH
    # 1-D iota comparisons (no full int32 (TH, W) index planes).
    row = h0 + lax.broadcasted_iota(jnp.int32, (TH, 1), 0)    # (TH, 1)
    col = lax.broadcasted_iota(jnp.int32, (1, W), 1)          # (1, W)
    row_ok = (row >= y1) & (row < y2)
    col_ok = (col >= x1) & (col < x2)
    inside = row_ok & col_ok                                  # (TH, W)

    img_out_ref[...] = jnp.where(inside[None, None],
                                 img_r_ref[...], img_ref[...])
    mask_out_ref[...] = jnp.where(inside[None],
                                  mask_r_ref[...], mask_ref[...])


def _pick_th(H, C, W, img_itemsize, mask_itemsize, budget_bytes):
    """Largest H-tile (multiple of 8 dividing H, or H itself) whose
    double-buffered per-step working set fits the budget."""
    per_row = 3 * C * W * img_itemsize + 3 * W * mask_itemsize
    candidates = [d for d in range(H, 0, -1)
                  if H % d == 0 and (d % 8 == 0 or d == H)]
    for th in candidates:
        if 2 * per_row * th <= budget_bytes:
            return th
    return candidates[-1]


@partial(jax.jit, static_argnames=("tile_budget_bytes",))
def _cutmix_paste_tiled(img, mask, box, tile_budget_bytes=_TILE_BUDGET_BYTES):
    B, C, H, W = img.shape
    TH = _pick_th(H, C, W,
                  np.dtype(img.dtype).itemsize,
                  np.dtype(mask.dtype).itemsize,
                  tile_budget_bytes)
    grid = (B, H // TH)
    kernel = partial(_cutmix_tiled_kernel, TH=TH)

    return pl.pallas_call(
        kernel,
        out_shape=(jax.ShapeDtypeStruct(img.shape, img.dtype),
                   jax.ShapeDtypeStruct(mask.shape, mask.dtype)),
        grid_spec=pltpu.PrefetchScalarGridSpec(
            num_scalar_prefetch=1,
            grid=grid,
            in_specs=[
                # original img tile
                pl.BlockSpec((1, C, TH, W), lambda b, h, box: (b, 0, h, 0)),
                # rolled img tile: rolled[b] = img[(b-1) % B]
                pl.BlockSpec((1, C, TH, W),
                             lambda b, h, box: ((b + B - 1) % B, 0, h, 0)),
                # original mask tile
                pl.BlockSpec((1, TH, W), lambda b, h, box: (b, h, 0)),
                # rolled mask tile
                pl.BlockSpec((1, TH, W),
                             lambda b, h, box: ((b + B - 1) % B, h, 0)),
            ],
            out_specs=[
                pl.BlockSpec((1, C, TH, W), lambda b, h, box: (b, 0, h, 0)),
                pl.BlockSpec((1, TH, W), lambda b, h, box: (b, h, 0)),
            ],
        ),
        compiler_params=pltpu.CompilerParams(
            dimension_semantics=("parallel", "parallel"),
            vmem_limit_bytes=_VMEM_LIMIT_BYTES,
        ),
    )(box, img, img, mask, mask)


def cutmix_paste(img, mask, box, tile_budget_bytes=_TILE_BUDGET_BYTES):
    """Paste rolled img/mask inside box = [y1, y2, x1, x2] (Pallas kernels)."""
    B, C, H, W = img.shape
    total_bytes = 2 * (B * C * H * W * np.dtype(img.dtype).itemsize
                       + B * H * W * np.dtype(mask.dtype).itemsize)
    w_pow2 = W > 0 and (W & (W - 1)) == 0
    if w_pow2 and total_bytes <= _SMALL_BYTES_LIMIT:
        return _cutmix_paste_small(img, mask, box)
    return _cutmix_paste_tiled(img, mask, box,
                               tile_budget_bytes=tile_budget_bytes)


# ---------------------------------------------------------------------------
# Module: host-side randomness (NumPy), no device->host syncs per call.
# ---------------------------------------------------------------------------
class CutMix:
    """JAX/Pallas re-implementation of the PyTorch CutMix module."""

    def __init__(self, p: float = 0.5, alpha: float = 1.0):
        self.p = p
        self.alpha = alpha

    def __call__(self, img, mask, rng: np.random.Generator | None = None):
        if rng is None:
            rng = np.random.default_rng()
        # if torch.rand(1).item() >= self.p: return (img, mask)
        if float(rng.random()) >= self.p:
            return img, mask

        B, C, H, W = img.shape
        # Dirichlet([alpha, alpha])[0] == Beta(alpha, alpha)
        lam = float(rng.beta(self.alpha, self.alpha))
        r_x = int(rng.integers(0, W))
        r_y = int(rng.integers(0, H))
        r = 0.5 * math.sqrt(1.0 - lam)
        r_w_half = int(r * W)
        r_h_half = int(r * H)
        x1 = max(r_x - r_w_half, 0)
        y1 = max(r_y - r_h_half, 0)
        x2 = min(r_x + r_w_half, W)
        y2 = min(r_y + r_h_half, H)

        box = jnp.array([y1, y2, x1, x2], dtype=jnp.int32)
        return cutmix_paste(img, mask, box)


# ---------------------------------------------------------------------------
# Reference + self-test
# ---------------------------------------------------------------------------
def _numpy_reference(img, mask, box):
    img = np.array(img).copy()
    mask = np.array(mask).copy()
    y1, y2, x1, x2 = [int(v) for v in np.array(box)]
    img_rolled = np.roll(img, 1, axis=0)
    mask_rolled = np.roll(mask, 1, axis=0)
    img[:, :, y1:y2, x1:x2] = img_rolled[:, :, y1:y2, x1:x2]
    mask[:, y1:y2, x1:x2] = mask_rolled[:, y1:y2, x1:x2]
    return img, mask


if __name__ == "__main__":
    key = jax.random.PRNGKey(0)
    k_img, k_mask = jax.random.split(key)

    # 1) Small path (lane-dense flattened kernel, read-once roll in VMEM).
    B, C, H, W = 2, 4, 16, 16
    img = jax.random.normal(k_img, (B, C, H, W), dtype=jnp.float32)
    mask = jax.random.randint(k_mask, (B, H, W), 0, 19, dtype=jnp.int32)

    box = jnp.array([4, 12, 2, 14], dtype=jnp.int32)
    out_img, out_mask = cutmix_paste(img, mask, box)
    jax.block_until_ready((out_img, out_mask))
    ref_img, ref_mask = _numpy_reference(img, mask, box)
    assert np.allclose(np.asarray(out_img), ref_img), "small path img mismatch"
    assert np.array_equal(np.asarray(out_mask), ref_mask), "small path mask mismatch"

    # 2) Tiled path: force TH < H with a tiny tile budget so the multi-tile
    #    row-offset logic and the (parallel, parallel) grid are exercised.
    k_img2, k_mask2 = jax.random.split(jax.random.PRNGKey(1))
    B2, C2, H2, W2 = 2, 3, 32, 128
    img2 = jax.random.normal(k_img2, (B2, C2, H2, W2), dtype=jnp.float32)
    mask2 = jax.random.randint(k_mask2, (B2, H2, W2), 0, 19, dtype=jnp.int32)
    box2 = jnp.array([5, 27, 17, 101], dtype=jnp.int32)
    out_img2, out_mask2 = _cutmix_paste_tiled(img2, mask2, box2,
                                              tile_budget_bytes=128 * 1024)
    jax.block_until_ready((out_img2, out_mask2))
    ref_img2, ref_mask2 = _numpy_reference(img2, mask2, box2)
    assert np.allclose(np.asarray(out_img2), ref_img2), "tiled path img mismatch"
    assert np.array_equal(np.asarray(out_mask2), ref_mask2), "tiled path mask mismatch"

    # 3) Faithful module call: host RNG only (no device syncs); with this seed
    #    the Bernoulli gate passes and the kernel path is exercised again
    #    (hits the jit cache from test 1).
    cm = CutMix(p=0.5, alpha=1.0)
    aug_img, aug_mask = cm(img, mask, rng=np.random.default_rng(2))
    jax.block_until_ready((aug_img, aug_mask))
    assert aug_img.shape == img.shape and aug_mask.shape == mask.shape

    print("KERNEL_OK")
</pallas_src>

<mosaic_0001>
module attributes {stable_mosaic.version = 11 : i64} {
  func.func @_cutmix_small_kernel(%arg0: i32, %arg1: memref<4xi32, #tpu.memory_space<smem>>, %arg2: memref<2x4x256xf32, #tpu.memory_space<vmem>>, %arg3: memref<2x1x256xi32, #tpu.memory_space<vmem>>, %arg4: memref<2x4x256xf32, #tpu.memory_space<vmem>>, %arg5: memref<2x1x256xi32, #tpu.memory_space<vmem>>) attributes {dimension_semantics = [#tpu.dimension_semantics<arbitrary>], iteration_bounds = array<i64: 1>, scalar_prefetch = 1 : i64, scratch_operands = 0 : i64, tpu.core_type = #tpu.core_type<tc>, window_params = [{pipeline_mode = #tpu.pipeline_mode<synchronous>, transform_indices = @transform_0, window_bounds = array<i64: 2, 4, 256>}, {pipeline_mode = #tpu.pipeline_mode<synchronous>, transform_indices = @transform_1, window_bounds = array<i64: 2, 1, 256>}, {pipeline_mode = #tpu.pipeline_mode<synchronous>, transform_indices = @transform_2, window_bounds = array<i64: 2, 4, 256>}, {pipeline_mode = #tpu.pipeline_mode<synchronous>, transform_indices = @transform_3, window_bounds = array<i64: 2, 1, 256>}]} {
    %c0 = arith.constant 0 : index
    %0 = memref.load %arg1[%c0] : memref<4xi32, #tpu.memory_space<smem>>
    %c1 = arith.constant 1 : index
    %1 = memref.load %arg1[%c1] : memref<4xi32, #tpu.memory_space<smem>>
    %c2 = arith.constant 2 : index
    %2 = memref.load %arg1[%c2] : memref<4xi32, #tpu.memory_space<smem>>
    %c3 = arith.constant 3 : index
    %3 = memref.load %arg1[%c3] : memref<4xi32, #tpu.memory_space<smem>>
    %4 = tpu.iota {dimensions = array<i32: 1>} : vector<1x256xi32>
    %c4_i32 = arith.constant 4 : i32
    %5 = vector.broadcast %c4_i32 : i32 to vector<1x256xi32>
    %6 = arith.shrsi %4, %5 : vector<1x256xi32>
    %c15_i32 = arith.constant 15 : i32
    %7 = vector.broadcast %c15_i32 : i32 to vector<1x256xi32>
    %8 = arith.andi %4, %7 : vector<1x256xi32>
    %9 = vector.broadcast %0 : i32 to vector<1x256xi32>
    %10 = arith.cmpi sge, %6, %9 : vector<1x256xi32>
    %11 = vector.broadcast %1 : i32 to vector<1x256xi32>
    %12 = arith.cmpi slt, %6, %11 : vector<1x256xi32>
    %13 = arith.andi %10, %12 : vector<1x256xi1>
    %14 = vector.broadcast %2 : i32 to vector<1x256xi32>
    %15 = arith.cmpi sge, %8, %14 : vector<1x256xi32>
    %16 = arith.andi %13, %15 : vector<1x256xi1>
    %17 = vector.broadcast %3 : i32 to vector<1x256xi32>
    %18 = arith.cmpi slt, %8, %17 : vector<1x256xi32>
    %19 = arith.andi %16, %18 : vector<1x256xi1>
    %c1_0 = arith.constant 1 : index
    %c0_1 = arith.constant 0 : index
    %c0_2 = arith.constant 0 : index
    %20 = vector.load %arg2[%c1_0, %c0_1, %c0_2] : memref<2x4x256xf32, #tpu.memory_space<vmem>>, vector<1x4x256xf32>
    %21 = vector.shape_cast %20 : vector<1x4x256xf32> to vector<4x256xf32>
    %c0_3 = arith.constant 0 : index
    %c0_4 = arith.constant 0 : index
    %c0_5 = arith.constant 0 : index
    %22 = vector.load %arg2[%c0_3, %c0_4, %c0_5] : memref<2x4x256xf32, #tpu.memory_space<vmem>>, vector<1x4x256xf32>
    %23 = vector.shape_cast %22 : vector<1x4x256xf32> to vector<4x256xf32>
    %24 = vector.shape_cast %19 : vector<1x256xi1> to vector<1x256xi1>
    %25 = vector.broadcast %24 : vector<1x256xi1> to vector<4x256xi1>
    %26 = arith.select %25, %21, %23 : vector<4x256xi1>, vector<4x256xf32>
    %c0_6 = arith.constant 0 : index
    %c0_7 = arith.constant 0 : index
    %c0_8 = arith.constant 0 : index
    %27 = vector.load %arg4[%c0_6, %c0_7, %c0_8] : memref<2x4x256xf32, #tpu.memory_space<vmem>>, vector<1x4x256xf32>
    %28 = vector.shape_cast %27 : vector<1x4x256xf32> to vector<4x256xf32>
    %29 = vector.shape_cast %26 : vector<4x256xf32> to vector<1x4x256xf32>
    tpu.vector_store %arg4[%c0_6, %c0_7, %c0_8], %29 {strides = array<i32>} : memref<2x4x256xf32, #tpu.memory_space<vmem>>, vector<1x4x256xf32>,
    %c1_9 = arith.constant 1 : index
    %c0_10 = arith.constant 0 : index
    %c0_11 = arith.constant 0 : index
    %30 = vector.load %arg3[%c1_9, %c0_10, %c0_11] : memref<2x1x256xi32, #tpu.memory_space<vmem>>, vector<1x1x256xi32>
    %31 = vector.shape_cast %30 : vector<1x1x256xi32> to vector<1x256xi32>
    %c0_12 = arith.constant 0 : index
    %c0_13 = arith.constant 0 : index
    %c0_14 = arith.constant 0 : index
    %32 = vector.load %arg3[%c0_12, %c0_13, %c0_14] : memref<2x1x256xi32, #tpu.memory_space<vmem>>, vector<1x1x256xi32>
    %33 = vector.shape_cast %32 : vector<1x1x256xi32> to vector<1x256xi32>
    %34 = arith.select %19, %31, %33 : vector<1x256xi1>, vector<1x256xi32>
    %c0_15 = arith.constant 0 : index
    %c0_16 = arith.constant 0 : index
    %c0_17 = arith.constant 0 : index
    %35 = vector.load %arg5[%c0_15, %c0_16, %c0_17] : memref<2x1x256xi32, #tpu.memory_space<vmem>>, vector<1x1x256xi32>
    %36 = vector.shape_cast %35 : vector<1x1x256xi32> to vector<1x256xi32>
    %37 = vector.shape_cast %34 : vector<1x256xi32> to vector<1x1x256xi32>
    tpu.vector_store %arg5[%c0_15, %c0_16, %c0_17], %37 {strides = array<i32>} : memref<2x1x256xi32, #tpu.memory_space<vmem>>, vector<1x1x256xi32>,
    %c0_18 = arith.constant 0 : index
    %c0_19 = arith.constant 0 : index
    %c0_20 = arith.constant 0 : index
    %38 = vector.load %arg2[%c0_18, %c0_19, %c0_20] : memref<2x4x256xf32, #tpu.memory_space<vmem>>, vector<1x4x256xf32>
    %39 = vector.shape_cast %38 : vector<1x4x256xf32> to vector<4x256xf32>
    %c1_21 = arith.constant 1 : index
    %c0_22 = arith.constant 0 : index
    %c0_23 = arith.constant 0 : index
    %40 = vector.load %arg2[%c1_21, %c0_22, %c0_23] : memref<2x4x256xf32, #tpu.memory_space<vmem>>, vector<1x4x256xf32>
    %41 = vector.shape_cast %40 : vector<1x4x256xf32> to vector<4x256xf32>
    %42 = vector.shape_cast %19 : vector<1x256xi1> to vector<1x256xi1>
    %43 = vector.broadcast %42 : vector<1x256xi1> to vector<4x256xi1>
    %44 = arith.select %43, %39, %41 : vector<4x256xi1>, vector<4x256xf32>
    %c1_24 = arith.constant 1 : index
    %c0_25 = arith.constant 0 : index
    %c0_26 = arith.constant 0 : index
    %45 = vector.load %arg4[%c1_24, %c0_25, %c0_26] : memref<2x4x256xf32, #tpu.memory_space<vmem>>, vector<1x4x256xf32>
    %46 = vector.shape_cast %45 : vector<1x4x256xf32> to vector<4x256xf32>
    %47 = vector.shape_cast %44 : vector<4x256xf32> to vector<1x4x256xf32>
    tpu.vector_store %arg4[%c1_24, %c0_25, %c0_26], %47 {strides = array<i32>} : memref<2x4x256xf32, #tpu.memory_space<vmem>>, vector<1x4x256xf32>,
    %c0_27 = arith.constant 0 : index
    %c0_28 = arith.constant 0 : index
    %c0_29 = arith.constant 0 : index
    %48 = vector.load %arg3[%c0_27, %c0_28, %c0_29] : memref<2x1x256xi32, #tpu.memory_space<vmem>>, vector<1x1x256xi32>
    %49 = vector.shape_cast %48 : vector<1x1x256xi32> to vector<1x256xi32>
    %c1_30 = arith.constant 1 : index
    %c0_31 = arith.constant 0 : index
    %c0_32 = arith.constant 0 : index
    %50 = vector.load %arg3[%c1_30, %c0_31, %c0_32] : memref<2x1x256xi32, #tpu.memory_space<vmem>>, vector<1x1x256xi32>
    %51 = vector.shape_cast %50 : vector<1x1x256xi32> to vector<1x256xi32>
    %52 = arith.select %19, %49, %51 : vector<1x256xi1>, vector<1x256xi32>
    %c1_33 = arith.constant 1 : index
    %c0_34 = arith.constant 0 : index
    %c0_35 = arith.constant 0 : index
    %53 = vector.load %arg5[%c1_33, %c0_34, %c0_35] : memref<2x1x256xi32, #tpu.memory_space<vmem>>, vector<1x1x256xi32>
    %54 = vector.shape_cast %53 : vector<1x1x256xi32> to vector<1x256xi32>
    %55 = vector.shape_cast %52 : vector<1x256xi32> to vector<1x1x256xi32>
    tpu.vector_store %arg5[%c1_33, %c0_34, %c0_35], %55 {strides = array<i32>} : memref<2x1x256xi32, #tpu.memory_space<vmem>>, vector<1x1x256xi32>,
    return
  }
  func.func @transform_0(%arg0: i32, %arg1: memref<4xi32, #tpu.memory_space<smem>>) -> (i32, i32, i32) {
    %c0_i32 = arith.constant 0 : i32
    %c0_i32_0 = arith.constant 0 : i32
    %c0_i32_1 = arith.constant 0 : i32
    %c0_i32_2 = arith.constant 0 : i32
    return %c0_i32, %c0_i32_0, %c0_i32_1 : i32, i32, i32
  }
  func.func @transform_1(%arg0: i32, %arg1: memref<4xi32, #tpu.memory_space<smem>>) -> (i32, i32, i32) {
    %c0_i32 = arith.constant 0 : i32
    %c0_i32_0 = arith.constant 0 : i32
    %c0_i32_1 = arith.constant 0 : i32
    %c0_i32_2 = arith.constant 0 : i32
    return %c0_i32, %c0_i32_0, %c0_i32_1 : i32, i32, i32
  }
  func.func @transform_2(%arg0: i32, %arg1: memref<4xi32, #tpu.memory_space<smem>>) -> (i32, i32, i32) {
    %c0_i32 = arith.constant 0 : i32
    %c0_i32_0 = arith.constant 0 : i32
    %c0_i32_1 = arith.constant 0 : i32
    %c0_i32_2 = arith.constant 0 : i32
    return %c0_i32, %c0_i32_0, %c0_i32_1 : i32, i32, i32
  }
  func.func @transform_3(%arg0: i32, %arg1: memref<4xi32, #tpu.memory_space<smem>>) -> (i32, i32, i32) {
    %c0_i32 = arith.constant 0 : i32
    %c0_i32_0 = arith.constant 0 : i32
    %c0_i32_1 = arith.constant 0 : i32
    %c0_i32_2 = arith.constant 0 : i32
    return %c0_i32, %c0_i32_0, %c0_i32_1 : i32, i32, i32
  }
}

</mosaic_0001>

<llo_original>
// kernel: _cutmix_paste_small.1
$region0: #{_cutmix_paste_small.1}
  #allocation0 [shape = 'u32[]', space=smem, size = 0x4, offset = 0x4, fixed_abs, tag = 'smem constant byte address 0x4 - core index']
  #allocation1 [shape = 'u32[144,128]{1,0:T(1,128)}', space=vmem, size = 0x12000, scoped, tag = 'internal scratch']
  #allocation2 [shape = 's32[1]{0}', space=sflag, size = 0x4, scoped, tag = 'scoped memory for _cutmix_paste_small.1']
  #allocation3 [shape = 'u8[512]{0}', space=smem, size = 0x200, scoped, tag = 'prefetched SMEM operand 0']
  %s0 = inlined_call_operand.vmem [shape: s32[4], index: 0, kind: input, shape index: {}]
  %s1 = inlined_call_operand.vmem [shape: f32[2,4,256], index: 1, kind: input, shape index: {}]
  %s2 = inlined_call_operand.vmem [shape: s32[2,1,256], index: 2, kind: input, shape index: {}]
  %s3 = inlined_call_operand.vmem [shape: f32[2,4,256], index: 3, kind: output, shape index: {0}]
  %s4 = inlined_call_operand.vmem [shape: s32[2,1,256], index: 4, kind: output, shape index: {1}]
  %5 = xla_tuple %s3, %s4
  %s6 = sld [smem:[#allocation0]]
  $region26: #{_cutmix_paste_small.1} parent=0
    _
  %s8 = ssub.s32 1, %s6
  %s9 = scalar_select 0, %s8, %s6
  %s10 = sshll.u32 %s0, 4
  %s11 = int_to_ptr.vmem [resolvable:$true] %s10
  %13 = dma.vmem_to_smem %s11, 16, [#allocation3], [#allocation2]
  %14 = dma.done [#allocation2], 16
  %15 = sfence
  // Predicated region
  $region2: #{_cutmix_paste_small.1} parent=0 // pred_check
    _
  $region3: #{_cutmix_paste_small.1} parent=0 // pred_check_branch
    %17 = sbr.rel (0) target = $region5
  $region4: #{_cutmix_paste_small.1} parent=0 // pred_region
    _
  $region5: #{_cutmix_paste_small.1} parent=0 // pred_fallthru
    _
  // Predicated region
  $region6: #{_cutmix_paste_small.1} parent=0 // pred_check
    _
  $region7: #{_cutmix_paste_small.1} parent=0 // pred_check_branch
    %19 = sbr.rel (0) target = $region9
  $region8: #{_cutmix_paste_small.1} parent=0 // pred_region
    _
  $region9: #{_cutmix_paste_small.1} parent=0 // pred_fallthru
    _
  %s20 = sld [smem:[#allocation3]]
  %s21 = sld [smem:[#allocation3 + $0x1]]
  %s22 = sld [smem:[#allocation3 + $0x2]]
  %s23 = sld [smem:[#allocation3 + $0x3]]
  %v24 = vlaneseq
  %v25 = vand.u32 %v24, 127
  %v26 = vadd.s32 %v25, 128
  %v27 = vshra.s32 %v25, 4
  %v28 = vshra.s32 %v26, 4
  %v29 = vand.u32 %v25, 15
  %v30 = vand.u32 %v26, 15
  %v31 = vstv %s20
  %vm32 = vcmp.ge.s32.totalorder %v27, %v31
  %vm33 = vcmp.ge.s32.totalorder %v28, %v31
  %v34 = vstv %s21
  %vm35 = vcmp.lt.s32.totalorder %v27, %v34
  %vm36 = vcmp.lt.s32.totalorder %v28, %v34
  %vm37 = vmand %vm32, %vm35
  %vm38 = vmand %vm33, %vm36
  %v39 = vstv %s22
  %vm40 = vcmp.ge.s32.totalorder %v29, %v39
  %vm41 = vcmp.ge.s32.totalorder %v30, %v39
  %vm42 = vmand %vm37, %vm40
  %vm43 = vmand %vm38, %vm41
  %v44 = vstv %s23
  %vm45 = vcmp.lt.s32.totalorder %v29, %v44
  %vm46 = vcmp.lt.s32.totalorder %v30, %v44
  %vm47 = vmand %vm42, %vm45
  %vm48 = vmand %vm43, %vm46
  %s49 = scalar_lea.vmem %s1, 8
  %v50 = vld [vmem:[%s49] sm:$0xff]
  %v51 = vld [vmem:[%s1] sm:$0xff]
  %v52 = vsel %vm47, 1, 0
  %v53 = vsel %vm48, 1, 0
  %vm54 = vcmp.eq.s32.totalorder %v52, 1
  %vm55 = vcmp.eq.s32.totalorder %v53, 1
  %v57 = vcombine.high %v50, %v50
  %v60 = vcombine.high %v51, %v51
  %v62 = vsel %vm54, %v50, %v51
  %v63 = vsel %vm55, %v57, %v60
  %v66 = vcombine.low %v62, %v63
  %68 = vst [vmem:[%s3] sm:$0xff] %v66
  %s69 = scalar_lea.vmem %s2, 2
  %v70 = vld [vmem:[%s69] sm:$0x3]
  %v71 = vld [vmem:[%s2] sm:$0x3]
  %v72 = vlaneseq
  %v73 = vshrl.u32 %v72, 7
  %v74 = vsub.s32 0, %v73
  %v75 = vrot.slane %v70, %v74
  %v76 = vlaneseq
  %v77 = vshrl.u32 %v76, 7
  %v78 = vsub.s32 1, %v77
  %v79 = vrot.slane %v70, %v78
  %v80 = vlaneseq
  %v81 = vshrl.u32 %v80, 7
  %v82 = vsub.s32 0, %v81
  %v83 = vrot.slane %v71, %v82
  %v84 = vlaneseq
  %v85 = vshrl.u32 %v84, 7
  %v86 = vsub.s32 1, %v85
  %v87 = vrot.slane %v71, %v86
  %v88 = vsel %vm47, %v75, %v83
  %v89 = vsel %vm48, %v79, %v87
  %v90 = vcombine.low %v88, %v89
  %v92 = vunpack.c.l.s4 1966171168
  %v93 = vunpack.c.0.s8 %v92
  %v94 = vlaneseq
  %v95 = vshrl.u32 %v94, 7
  %v96 = vsub.s32 %v93, %v95
  %v97 = vrot.slane %v90, %v96
  %v99 = vunpack.c.l.s4 1966171168
  %v100 = vunpack.c.0.s8 %v99
  %v101 = vlaneseq
  %v102 = vshrl.u32 %v101, 7
  %v103 = vsub.s32 %v100, %v102
  %v104 = vrot.slane %v97, %v103
  %v105 = vlaneseq
  %vm106 = vcmp.ge.s32.totalorder %v105, 0
  %vm107 = vcmp.lt.s32.totalorder %v105, 256
  %vm108 = vmand %vm106, %vm107
  %109 = vst.msk [vmem:[%s4] sm:$0x3] %vm108, %v104
  %v110 = vld [vmem:[%s1] sm:$0xff]
  %v111 = vld [vmem:[%s49] sm:$0xff]
  %v113 = vcombine.high %v110, %v110
  %v116 = vcombine.high %v111, %v111
  %v118 = vsel %vm54, %v110, %v111
  %v119 = vsel %vm55, %v113, %v116
  %v122 = vcombine.low %v118, %v119
  %s124 = scalar_lea.vmem %s3, 8
  %125 = vst [vmem:[%s124] sm:$0xff] %v122
  %v126 = vld [vmem:[%s2] sm:$0x3]
  %v127 = vld [vmem:[%s69] sm:$0x3]
  %v128 = vlaneseq
  %v129 = vshrl.u32 %v128, 7
  %v130 = vsub.s32 0, %v129
  %v131 = vrot.slane %v126, %v130
  %v132 = vlaneseq
  %v133 = vshrl.u32 %v132, 7
  %v134 = vsub.s32 1, %v133
  %v135 = vrot.slane %v126, %v134
  %v136 = vlaneseq
  %v137 = vshrl.u32 %v136, 7
  %v138 = vsub.s32 0, %v137
  %v139 = vrot.slane %v127, %v138
  %v140 = vlaneseq
  %v141 = vshrl.u32 %v140, 7
  %v142 = vsub.s32 1, %v141
  %v143 = vrot.slane %v127, %v142
  %v144 = vsel %vm47, %v131, %v139
  %v145 = vsel %vm48, %v135, %v143
  %v146 = vcombine.low %v144, %v145
  %v148 = vunpack.c.l.s4 1966171168
  %v149 = vunpack.c.0.s8 %v148
  %v150 = vlaneseq
  %v151 = vshrl.u32 %v150, 7
  %v152 = vsub.s32 %v149, %v151
  %v153 = vrot.slane %v146, %v152
  %v155 = vunpack.c.l.s4 1966171168
  %v156 = vunpack.c.0.s8 %v155
  %v157 = vlaneseq
  %v158 = vshrl.u32 %v157, 7
  %v159 = vsub.s32 %v156, %v158
  %v160 = vrot.slane %v153, %v159
  %s161 = scalar_lea.vmem %s4, 2
  %162 = vst.msk [vmem:[%s161] sm:$0x3] %vm108, %v160
  // Predicated region
  $region10: #{_cutmix_paste_small.1} parent=0 // pred_check
    _
  $region11: #{_cutmix_paste_small.1} parent=0 // pred_check_branch
    %164 = sbr.rel (0) target = $region13
  $region12: #{_cutmix_paste_small.1} parent=0 // pred_region
    _
  $region13: #{_cutmix_paste_small.1} parent=0 // pred_fallthru
    _
  // Predicated region
  $region14: #{_cutmix_paste_small.1} parent=0 // pred_check
    _
  $region15: #{_cutmix_paste_small.1} parent=0 // pred_check_branch
    %166 = sbr.rel (0) target = $region17
  $region16: #{_cutmix_paste_small.1} parent=0 // pred_region
    _
  $region17: #{_cutmix_paste_small.1} parent=0 // pred_fallthru
    _
  // Predicated region
  $region18: #{_cutmix_paste_small.1} parent=0 // pred_check
    _
  $region19: #{_cutmix_paste_small.1} parent=0 // pred_check_branch
    %168 = sbr.rel (0) target = $region21
  $region20: #{_cutmix_paste_small.1} parent=0 // pred_region
    _
  $region21: #{_cutmix_paste_small.1} parent=0 // pred_fallthru
    _
  // Predicated region
  $region22: #{_cutmix_paste_small.1} parent=0 // pred_check
    _
  $region23: #{_cutmix_paste_small.1} parent=0 // pred_check_branch
    %170 = sbr.rel (0) target = $region25
  $region24: #{_cutmix_paste_small.1} parent=0 // pred_region
    _
  $region25: #{_cutmix_paste_small.1} parent=0 // pred_fallthru
    _

</llo_original>
